<compile_context>
chip_gen: v5e
topology: v5e:2x2
jax: 0.10.0
libtpu: 0.0.40
codegen_flags: <defaults>
</compile_context>

<pallas_src>
import functools
import math

import jax
import jax.numpy as jnp
from jax.experimental import pallas as pl
from jax.experimental.pallas import tpu as pltpu


# ----------------------------------------------------------------------------
# Pallas kernel: whole sequence, one invocation, everything resident in VMEM.
#   x     : (B, T, D_in)        batch-first input, as-is from the caller
#   wih   : (D_in, 4H)          W_ih^T
#   whh   : (H, 4H)             W_hh^T
#   b     : (1, 4H)             b_ih + b_hh (pre-summed)
#   wfcbd : (T*H, T*D_out)      block-diagonal stack of W_fc^T
#   bfc   : (1, T*D_out)        b_fc tiled T times
#   o     : (B, T*D_out)        batch-major, lane-dense output slab
# ----------------------------------------------------------------------------
def audio_to_joints_kernel(x_ref, wih_ref, whh_ref, b_ref, wfcbd_ref, bfc_ref,
                           o_ref, *, seq_len, batch, hidden):
    T, B, H = seq_len, batch, hidden
    D_in = x_ref.shape[-1]

    # (1) Hoisted input projection + bias for ALL (b, t) rows in one MXU matmul.
    #     (B, T, D_in) -> (B*T, D_in) is a major-dim collapse (free in vregs).
    x2 = x_ref[...].reshape(B * T, D_in).astype(jnp.float32)
    gates_x = (jnp.dot(x2, wih_ref[...], preferred_element_type=jnp.float32)
               + b_ref[...])                                  # (B*T, 4H) batch-major
    gx = gates_x.reshape(B, T, 4 * H)                         # free major-dim split

    w_hh = whh_ref[...]                                       # (H, 4H), loop-invariant

    # (2) Sequential recurrence. T is a small static constant, so a trace-time
    #     unrolled loop gives the scheduler full visibility; h / c / all h_t
    #     live in vregs for the entire recurrence (no VMEM round-trips).
    h = jnp.zeros((B, H), jnp.float32)
    c = jnp.zeros((B, H), jnp.float32)
    hs = []
    for t in range(T):
        gates = gx[:, t, :] + jnp.dot(h, w_hh,
                                      preferred_element_type=jnp.float32)  # (B, 4H)
        # PyTorch gate order i, f, g, o. Apply each nonlinearity ONCE to the
        # full (B, 4H=128) vreg (2 EUP pushes instead of 4) and take the gate
        # pieces as static lane slices (cheap, off the EUP slot).
        sig = jax.nn.sigmoid(gates)          # covers i, f, o
        tnh = jnp.tanh(gates)                # covers g
        i_g = sig[:, 0 * H:1 * H]
        f_g = sig[:, 1 * H:2 * H]
        g_g = tnh[:, 2 * H:3 * H]
        o_g = sig[:, 3 * H:4 * H]
        c = f_g * c + i_g * g_g
        h = o_g * jnp.tanh(c)
        hs.append(h)

    # (3) Keep hidden states in registers: lane-dim concat -> (B, T*H), so
    #     column block t holds h_t. Dropout (eval mode) is identity.
    hs_wide = jnp.concatenate(hs, axis=1)                     # (B, T*H)

    # (4) Deferred FC as ONE matmul against the block-diagonal weight. The
    #     result is already batch-major and lane-dense (T*D_out == 128 here),
    #     so the single store below is an unmasked full-lane vst.
    out = (jnp.dot(hs_wide, wfcbd_ref[...],
                   preferred_element_type=jnp.float32)
           + bfc_ref[...])                                    # (B, T*D_out)
    o_ref[...] = out.astype(o_ref.dtype)


# ----------------------------------------------------------------------------
# Wrapper
# ----------------------------------------------------------------------------
def audio_to_joints(inputs, params, seq_len):
    """inputs: (B, T, D_in) batch-first, exactly like the PyTorch module."""
    B, T, D_in = inputs.shape
    assert T == seq_len
    H = params["w_hh_t"].shape[0]
    D_out = params["w_fc_t"].shape[1]

    # Block-diagonal FC weight (T*H, T*D_out) and tiled bias so the whole
    # sequence is projected by a single matmul producing a lane-dense slab.
    w_fc_bd = jnp.kron(jnp.eye(T, dtype=jnp.float32), params["w_fc_t"])
    b_fc_wide = jnp.tile(params["b_fc"], (1, T))

    vmem = pl.BlockSpec(memory_space=pltpu.MemorySpace.VMEM)
    out_wide = pl.pallas_call(
        functools.partial(audio_to_joints_kernel,
                          seq_len=T, batch=B, hidden=H),
        out_shape=jax.ShapeDtypeStruct((B, T * D_out), jnp.float32),
        in_specs=[vmem] * 6,              # whole-array VMEM blocks, no grid
        out_specs=vmem,
    )(inputs, params["w_ih_t"], params["w_hh_t"], params["b"],
      w_fc_bd, b_fc_wide)

    # (B, T*D_out) -> (B, T, D_out): minor-dim split only (bitcast-level
    # reshape, no relayout / transpose HLO). Matches the PyTorch
    # reshape(-1, seq_len, output_dim) on a batch-first LSTM output.
    return out_wide.reshape(-1, seq_len, D_out)


# ----------------------------------------------------------------------------
# Deterministic parameter init (mirrors AudioToJoints.initialize())
# ----------------------------------------------------------------------------
def init_params(key, input_dim, hidden_dim, output_dim):
    def xavier_normal(k, shape):
        fan_out, fan_in = shape
        std = math.sqrt(2.0 / (fan_in + fan_out))
        return std * jax.random.normal(k, shape, dtype=jnp.float32)

    k1, k2, k3, k4, k5 = jax.random.split(key, 5)
    w_ih = xavier_normal(k1, (4 * hidden_dim, input_dim))    # PyTorch layout
    w_hh = xavier_normal(k2, (4 * hidden_dim, hidden_dim))
    b_ih = jax.random.uniform(k3, (4 * hidden_dim,), jnp.float32, 0.25, 0.5)
    b_hh = jax.random.uniform(k4, (4 * hidden_dim,), jnp.float32, 0.25, 0.5)
    w_fc = xavier_normal(k5, (output_dim, hidden_dim))
    b_fc = jnp.zeros((output_dim,), jnp.float32)

    return {
        "w_ih_t": w_ih.T,                          # (D_in, 4H)
        "w_hh_t": w_hh.T,                          # (H, 4H)
        "b": (b_ih + b_hh).reshape(1, -1),         # (1, 4H) pre-summed
        "w_fc_t": w_fc.T,                          # (H, D_out)
        "b_fc": b_fc.reshape(1, -1),               # (1, D_out)
    }


# ----------------------------------------------------------------------------
# Pure-JAX reference (lax.scan LSTM + plain FC) for correctness checking.
# Uses the un-blocked FC weight, so it also validates the block-diag packing.
# ----------------------------------------------------------------------------
def reference(inputs, params, seq_len):
    B, T, D_in = inputs.shape
    H = params["w_hh_t"].shape[0]

    def step(carry, x_t):
        h, c = carry
        gates = x_t @ params["w_ih_t"] + h @ params["w_hh_t"] + params["b"]
        i_g = jax.nn.sigmoid(gates[:, 0 * H:1 * H])
        f_g = jax.nn.sigmoid(gates[:, 1 * H:2 * H])
        g_g = jnp.tanh(gates[:, 2 * H:3 * H])
        o_g = jax.nn.sigmoid(gates[:, 3 * H:4 * H])
        c_new = f_g * c + i_g * g_g
        h_new = o_g * jnp.tanh(c_new)
        return (h_new, c_new), h_new

    x_tm = jnp.transpose(inputs, (1, 0, 2)).astype(jnp.float32)
    h0 = jnp.zeros((B, H), jnp.float32)
    _, hs = jax.lax.scan(step, (h0, h0), x_tm)            # (T, B, H)
    out = jnp.transpose(hs, (1, 0, 2)).reshape(-1, H)     # (B*T, H) batch-major
    preds = out @ params["w_fc_t"] + params["b_fc"]
    return preds.reshape(-1, seq_len, params["w_fc_t"].shape[1])


if __name__ == "__main__":
    # options: input_dim=16, hidden_dim=32, output_dim=16, seq_len=8, dropout=0.1
    B, SEQ_LEN, INPUT_DIM, HIDDEN_DIM, OUTPUT_DIM = 2, 8, 16, 32, 16

    key = jax.random.PRNGKey(0)
    k_params, k_inp = jax.random.split(key)
    params = init_params(k_params, INPUT_DIM, HIDDEN_DIM, OUTPUT_DIM)
    inputs = jax.random.normal(k_inp, (B, SEQ_LEN, INPUT_DIM), dtype=jnp.float32)

    preds = audio_to_joints(inputs, params, SEQ_LEN)
    preds = jax.block_until_ready(preds)

    ref = jax.block_until_ready(reference(inputs, params, SEQ_LEN))
    assert preds.shape == (B, SEQ_LEN, OUTPUT_DIM), preds.shape
    assert jnp.allclose(preds, ref, atol=1e-5, rtol=1e-5), "mismatch vs reference"

    print("KERNEL_OK")
</pallas_src>

<mosaic_0001>
module attributes {stable_mosaic.version = 11 : i64} {
  func.func @audio_to_joints_kernel(%arg0: memref<2x8x16xf32, #tpu.memory_space<vmem>>, %arg1: memref<16x128xf32, #tpu.memory_space<vmem>>, %arg2: memref<32x128xf32, #tpu.memory_space<vmem>>, %arg3: memref<1x128xf32, #tpu.memory_space<vmem>>, %arg4: memref<256x128xf32, #tpu.memory_space<vmem>>, %arg5: memref<1x128xf32, #tpu.memory_space<vmem>>, %arg6: memref<2x128xf32, #tpu.memory_space<vmem>>) attributes {dimension_semantics = [], scalar_prefetch = 0 : i64, scratch_operands = 0 : i64, tpu.core_type = #tpu.core_type<tc>} {
    %c0 = arith.constant 0 : index
    %c0_0 = arith.constant 0 : index
    %c0_1 = arith.constant 0 : index
    %0 = vector.load %arg0[%c0, %c0_0, %c0_1] : memref<2x8x16xf32, #tpu.memory_space<vmem>>, vector<2x8x16xf32>
    %1 = vector.shape_cast %0 : vector<2x8x16xf32> to vector<16x16xf32>
    %c0_2 = arith.constant 0 : index
    %c0_3 = arith.constant 0 : index
    %2 = vector.load %arg1[%c0_2, %c0_3] : memref<16x128xf32, #tpu.memory_space<vmem>>, vector<16x128xf32>
    %cst = arith.constant dense<0.000000e+00> : vector<16x128xf32>
    %3 = tpu.matmul %1, %2, %cst {dimension_numbers = #tpu.dot_dimension_numbers<[1], [0], [0], [1], [0, 0, 1, 1], [], []>} : vector<16x16xf32>, vector<16x128xf32>, vector<16x128xf32> -> vector<16x128xf32>
    %c0_4 = arith.constant 0 : index
    %c0_5 = arith.constant 0 : index
    %4 = vector.load %arg3[%c0_4, %c0_5] : memref<1x128xf32, #tpu.memory_space<vmem>>, vector<1x128xf32>
    %5 = vector.broadcast %4 : vector<1x128xf32> to vector<16x128xf32>
    %6 = arith.addf %3, %5 : vector<16x128xf32>
    %7 = vector.shape_cast %6 : vector<16x128xf32> to vector<2x8x128xf32>
    %c0_6 = arith.constant 0 : index
    %c0_7 = arith.constant 0 : index
    %8 = vector.load %arg2[%c0_6, %c0_7] : memref<32x128xf32, #tpu.memory_space<vmem>>, vector<32x128xf32>
    %cst_8 = arith.constant 0.000000e+00 : f32
    %9 = vector.broadcast %cst_8 : f32 to vector<2x32xf32>
    %cst_9 = arith.constant 0.000000e+00 : f32
    %10 = vector.broadcast %cst_9 : f32 to vector<2x32xf32>
    %11 = vector.extract_strided_slice %7 {offsets = [0, 0, 0], sizes = [2, 1, 128], strides = [1, 1, 1]} : vector<2x8x128xf32> to vector<2x1x128xf32>
    %12 = vector.shape_cast %11 : vector<2x1x128xf32> to vector<2x128xf32>
    %cst_10 = arith.constant dense<0.000000e+00> : vector<2x128xf32>
    %13 = tpu.matmul %9, %8, %cst_10 {dimension_numbers = #tpu.dot_dimension_numbers<[1], [0], [0], [1], [0, 0, 1, 1], [], []>} : vector<2x32xf32>, vector<32x128xf32>, vector<2x128xf32> -> vector<2x128xf32>
    %14 = arith.addf %12, %13 : vector<2x128xf32>
    %15 = arith.negf %14 : vector<2x128xf32>
    %16 = math.exp %15 : vector<2x128xf32>
    %cst_11 = arith.constant 1.000000e+00 : f32
    %17 = vector.broadcast %cst_11 : f32 to vector<2x128xf32>
    %18 = arith.addf %17, %16 : vector<2x128xf32>
    %19 = arith.divf %17, %18 : vector<2x128xf32>
    %20 = math.tanh %14 : vector<2x128xf32>
    %21 = vector.extract_strided_slice %19 {offsets = [0, 0], sizes = [2, 32], strides = [1, 1]} : vector<2x128xf32> to vector<2x32xf32>
    %22 = vector.extract_strided_slice %19 {offsets = [0, 32], sizes = [2, 32], strides = [1, 1]} : vector<2x128xf32> to vector<2x32xf32>
    %23 = vector.extract_strided_slice %20 {offsets = [0, 64], sizes = [2, 32], strides = [1, 1]} : vector<2x128xf32> to vector<2x32xf32>
    %24 = vector.extract_strided_slice %19 {offsets = [0, 96], sizes = [2, 32], strides = [1, 1]} : vector<2x128xf32> to vector<2x32xf32>
    %25 = arith.mulf %22, %10 : vector<2x32xf32>
    %26 = arith.mulf %21, %23 : vector<2x32xf32>
    %27 = arith.addf %25, %26 : vector<2x32xf32>
    %28 = math.tanh %27 : vector<2x32xf32>
    %29 = arith.mulf %24, %28 : vector<2x32xf32>
    %30 = vector.extract_strided_slice %7 {offsets = [0, 1, 0], sizes = [2, 1, 128], strides = [1, 1, 1]} : vector<2x8x128xf32> to vector<2x1x128xf32>
    %31 = vector.shape_cast %30 : vector<2x1x128xf32> to vector<2x128xf32>
    %cst_12 = arith.constant dense<0.000000e+00> : vector<2x128xf32>
    %32 = tpu.matmul %29, %8, %cst_12 {dimension_numbers = #tpu.dot_dimension_numbers<[1], [0], [0], [1], [0, 0, 1, 1], [], []>} : vector<2x32xf32>, vector<32x128xf32>, vector<2x128xf32> -> vector<2x128xf32>
    %33 = arith.addf %31, %32 : vector<2x128xf32>
    %34 = arith.negf %33 : vector<2x128xf32>
    %35 = math.exp %34 : vector<2x128xf32>
    %cst_13 = arith.constant 1.000000e+00 : f32
    %36 = vector.broadcast %cst_13 : f32 to vector<2x128xf32>
    %37 = arith.addf %36, %35 : vector<2x128xf32>
    %38 = arith.divf %36, %37 : vector<2x128xf32>
    %39 = math.tanh %33 : vector<2x128xf32>
    %40 = vector.extract_strided_slice %38 {offsets = [0, 0], sizes = [2, 32], strides = [1, 1]} : vector<2x128xf32> to vector<2x32xf32>
    %41 = vector.extract_strided_slice %38 {offsets = [0, 32], sizes = [2, 32], strides = [1, 1]} : vector<2x128xf32> to vector<2x32xf32>
    %42 = vector.extract_strided_slice %39 {offsets = [0, 64], sizes = [2, 32], strides = [1, 1]} : vector<2x128xf32> to vector<2x32xf32>
    %43 = vector.extract_strided_slice %38 {offsets = [0, 96], sizes = [2, 32], strides = [1, 1]} : vector<2x128xf32> to vector<2x32xf32>
    %44 = arith.mulf %41, %27 : vector<2x32xf32>
    %45 = arith.mulf %40, %42 : vector<2x32xf32>
    %46 = arith.addf %44, %45 : vector<2x32xf32>
    %47 = math.tanh %46 : vector<2x32xf32>
    %48 = arith.mulf %43, %47 : vector<2x32xf32>
    %49 = vector.extract_strided_slice %7 {offsets = [0, 2, 0], sizes = [2, 1, 128], strides = [1, 1, 1]} : vector<2x8x128xf32> to vector<2x1x128xf32>
    %50 = vector.shape_cast %49 : vector<2x1x128xf32> to vector<2x128xf32>
    %cst_14 = arith.constant dense<0.000000e+00> : vector<2x128xf32>
    %51 = tpu.matmul %48, %8, %cst_14 {dimension_numbers = #tpu.dot_dimension_numbers<[1], [0], [0], [1], [0, 0, 1, 1], [], []>} : vector<2x32xf32>, vector<32x128xf32>, vector<2x128xf32> -> vector<2x128xf32>
    %52 = arith.addf %50, %51 : vector<2x128xf32>
    %53 = arith.negf %52 : vector<2x128xf32>
    %54 = math.exp %53 : vector<2x128xf32>
    %cst_15 = arith.constant 1.000000e+00 : f32
    %55 = vector.broadcast %cst_15 : f32 to vector<2x128xf32>
    %56 = arith.addf %55, %54 : vector<2x128xf32>
    %57 = arith.divf %55, %56 : vector<2x128xf32>
    %58 = math.tanh %52 : vector<2x128xf32>
    %59 = vector.extract_strided_slice %57 {offsets = [0, 0], sizes = [2, 32], strides = [1, 1]} : vector<2x128xf32> to vector<2x32xf32>
    %60 = vector.extract_strided_slice %57 {offsets = [0, 32], sizes = [2, 32], strides = [1, 1]} : vector<2x128xf32> to vector<2x32xf32>
    %61 = vector.extract_strided_slice %58 {offsets = [0, 64], sizes = [2, 32], strides = [1, 1]} : vector<2x128xf32> to vector<2x32xf32>
    %62 = vector.extract_strided_slice %57 {offsets = [0, 96], sizes = [2, 32], strides = [1, 1]} : vector<2x128xf32> to vector<2x32xf32>
    %63 = arith.mulf %60, %46 : vector<2x32xf32>
    %64 = arith.mulf %59, %61 : vector<2x32xf32>
    %65 = arith.addf %63, %64 : vector<2x32xf32>
    %66 = math.tanh %65 : vector<2x32xf32>
    %67 = arith.mulf %62, %66 : vector<2x32xf32>
    %68 = vector.extract_strided_slice %7 {offsets = [0, 3, 0], sizes = [2, 1, 128], strides = [1, 1, 1]} : vector<2x8x128xf32> to vector<2x1x128xf32>
    %69 = vector.shape_cast %68 : vector<2x1x128xf32> to vector<2x128xf32>
    %cst_16 = arith.constant dense<0.000000e+00> : vector<2x128xf32>
    %70 = tpu.matmul %67, %8, %cst_16 {dimension_numbers = #tpu.dot_dimension_numbers<[1], [0], [0], [1], [0, 0, 1, 1], [], []>} : vector<2x32xf32>, vector<32x128xf32>, vector<2x128xf32> -> vector<2x128xf32>
    %71 = arith.addf %69, %70 : vector<2x128xf32>
    %72 = arith.negf %71 : vector<2x128xf32>
    %73 = math.exp %72 : vector<2x128xf32>
    %cst_17 = arith.constant 1.000000e+00 : f32
    %74 = vector.broadcast %cst_17 : f32 to vector<2x128xf32>
    %75 = arith.addf %74, %73 : vector<2x128xf32>
    %76 = arith.divf %74, %75 : vector<2x128xf32>
    %77 = math.tanh %71 : vector<2x128xf32>
    %78 = vector.extract_strided_slice %76 {offsets = [0, 0], sizes = [2, 32], strides = [1, 1]} : vector<2x128xf32> to vector<2x32xf32>
    %79 = vector.extract_strided_slice %76 {offsets = [0, 32], sizes = [2, 32], strides = [1, 1]} : vector<2x128xf32> to vector<2x32xf32>
    %80 = vector.extract_strided_slice %77 {offsets = [0, 64], sizes = [2, 32], strides = [1, 1]} : vector<2x128xf32> to vector<2x32xf32>
    %81 = vector.extract_strided_slice %76 {offsets = [0, 96], sizes = [2, 32], strides = [1, 1]} : vector<2x128xf32> to vector<2x32xf32>
    %82 = arith.mulf %79, %65 : vector<2x32xf32>
    %83 = arith.mulf %78, %80 : vector<2x32xf32>
    %84 = arith.addf %82, %83 : vector<2x32xf32>
    %85 = math.tanh %84 : vector<2x32xf32>
    %86 = arith.mulf %81, %85 : vector<2x32xf32>
    %87 = vector.extract_strided_slice %7 {offsets = [0, 4, 0], sizes = [2, 1, 128], strides = [1, 1, 1]} : vector<2x8x128xf32> to vector<2x1x128xf32>
    %88 = vector.shape_cast %87 : vector<2x1x128xf32> to vector<2x128xf32>
    %cst_18 = arith.constant dense<0.000000e+00> : vector<2x128xf32>
    %89 = tpu.matmul %86, %8, %cst_18 {dimension_numbers = #tpu.dot_dimension_numbers<[1], [0], [0], [1], [0, 0, 1, 1], [], []>} : vector<2x32xf32>, vector<32x128xf32>, vector<2x128xf32> -> vector<2x128xf32>
    %90 = arith.addf %88, %89 : vector<2x128xf32>
    %91 = arith.negf %90 : vector<2x128xf32>
    %92 = math.exp %91 : vector<2x128xf32>
    %cst_19 = arith.constant 1.000000e+00 : f32
    %93 = vector.broadcast %cst_19 : f32 to vector<2x128xf32>
    %94 = arith.addf %93, %92 : vector<2x128xf32>
    %95 = arith.divf %93, %94 : vector<2x128xf32>
    %96 = math.tanh %90 : vector<2x128xf32>
    %97 = vector.extract_strided_slice %95 {offsets = [0, 0], sizes = [2, 32], strides = [1, 1]} : vector<2x128xf32> to vector<2x32xf32>
    %98 = vector.extract_strided_slice %95 {offsets = [0, 32], sizes = [2, 32], strides = [1, 1]} : vector<2x128xf32> to vector<2x32xf32>
    %99 = vector.extract_strided_slice %96 {offsets = [0, 64], sizes = [2, 32], strides = [1, 1]} : vector<2x128xf32> to vector<2x32xf32>
    %100 = vector.extract_strided_slice %95 {offsets = [0, 96], sizes = [2, 32], strides = [1, 1]} : vector<2x128xf32> to vector<2x32xf32>
    %101 = arith.mulf %98, %84 : vector<2x32xf32>
    %102 = arith.mulf %97, %99 : vector<2x32xf32>
    %103 = arith.addf %101, %102 : vector<2x32xf32>
    %104 = math.tanh %103 : vector<2x32xf32>
    %105 = arith.mulf %100, %104 : vector<2x32xf32>
    %106 = vector.extract_strided_slice %7 {offsets = [0, 5, 0], sizes = [2, 1, 128], strides = [1, 1, 1]} : vector<2x8x128xf32> to vector<2x1x128xf32>
    %107 = vector.shape_cast %106 : vector<2x1x128xf32> to vector<2x128xf32>
    %cst_20 = arith.constant dense<0.000000e+00> : vector<2x128xf32>
    %108 = tpu.matmul %105, %8, %cst_20 {dimension_numbers = #tpu.dot_dimension_numbers<[1], [0], [0], [1], [0, 0, 1, 1], [], []>} : vector<2x32xf32>, vector<32x128xf32>, vector<2x128xf32> -> vector<2x128xf32>
    %109 = arith.addf %107, %108 : vector<2x128xf32>
    %110 = arith.negf %109 : vector<2x128xf32>
    %111 = math.exp %110 : vector<2x128xf32>
    %cst_21 = arith.constant 1.000000e+00 : f32
    %112 = vector.broadcast %cst_21 : f32 to vector<2x128xf32>
    %113 = arith.addf %112, %111 : vector<2x128xf32>
    %114 = arith.divf %112, %113 : vector<2x128xf32>
    %115 = math.tanh %109 : vector<2x128xf32>
    %116 = vector.extract_strided_slice %114 {offsets = [0, 0], sizes = [2, 32], strides = [1, 1]} : vector<2x128xf32> to vector<2x32xf32>
    %117 = vector.extract_strided_slice %114 {offsets = [0, 32], sizes = [2, 32], strides = [1, 1]} : vector<2x128xf32> to vector<2x32xf32>
    %118 = vector.extract_strided_slice %115 {offsets = [0, 64], sizes = [2, 32], strides = [1, 1]} : vector<2x128xf32> to vector<2x32xf32>
    %119 = vector.extract_strided_slice %114 {offsets = [0, 96], sizes = [2, 32], strides = [1, 1]} : vector<2x128xf32> to vector<2x32xf32>
    %120 = arith.mulf %117, %103 : vector<2x32xf32>
    %121 = arith.mulf %116, %118 : vector<2x32xf32>
    %122 = arith.addf %120, %121 : vector<2x32xf32>
    %123 = math.tanh %122 : vector<2x32xf32>
    %124 = arith.mulf %119, %123 : vector<2x32xf32>
    %125 = vector.extract_strided_slice %7 {offsets = [0, 6, 0], sizes = [2, 1, 128], strides = [1, 1, 1]} : vector<2x8x128xf32> to vector<2x1x128xf32>
    %126 = vector.shape_cast %125 : vector<2x1x128xf32> to vector<2x128xf32>
    %cst_22 = arith.constant dense<0.000000e+00> : vector<2x128xf32>
    %127 = tpu.matmul %124, %8, %cst_22 {dimension_numbers = #tpu.dot_dimension_numbers<[1], [0], [0], [1], [0, 0, 1, 1], [], []>} : vector<2x32xf32>, vector<32x128xf32>, vector<2x128xf32> -> vector<2x128xf32>
    %128 = arith.addf %126, %127 : vector<2x128xf32>
    %129 = arith.negf %128 : vector<2x128xf32>
    %130 = math.exp %129 : vector<2x128xf32>
    %cst_23 = arith.constant 1.000000e+00 : f32
    %131 = vector.broadcast %cst_23 : f32 to vector<2x128xf32>
    %132 = arith.addf %131, %130 : vector<2x128xf32>
    %133 = arith.divf %131, %132 : vector<2x128xf32>
    %134 = math.tanh %128 : vector<2x128xf32>
    %135 = vector.extract_strided_slice %133 {offsets = [0, 0], sizes = [2, 32], strides = [1, 1]} : vector<2x128xf32> to vector<2x32xf32>
    %136 = vector.extract_strided_slice %133 {offsets = [0, 32], sizes = [2, 32], strides = [1, 1]} : vector<2x128xf32> to vector<2x32xf32>
    %137 = vector.extract_strided_slice %134 {offsets = [0, 64], sizes = [2, 32], strides = [1, 1]} : vector<2x128xf32> to vector<2x32xf32>
    %138 = vector.extract_strided_slice %133 {offsets = [0, 96], sizes = [2, 32], strides = [1, 1]} : vector<2x128xf32> to vector<2x32xf32>
    %139 = arith.mulf %136, %122 : vector<2x32xf32>
    %140 = arith.mulf %135, %137 : vector<2x32xf32>
    %141 = arith.addf %139, %140 : vector<2x32xf32>
    %142 = math.tanh %141 : vector<2x32xf32>
    %143 = arith.mulf %138, %142 : vector<2x32xf32>
    %144 = vector.extract_strided_slice %7 {offsets = [0, 7, 0], sizes = [2, 1, 128], strides = [1, 1, 1]} : vector<2x8x128xf32> to vector<2x1x128xf32>
    %145 = vector.shape_cast %144 : vector<2x1x128xf32> to vector<2x128xf32>
    %cst_24 = arith.constant dense<0.000000e+00> : vector<2x128xf32>
    %146 = tpu.matmul %143, %8, %cst_24 {dimension_numbers = #tpu.dot_dimension_numbers<[1], [0], [0], [1], [0, 0, 1, 1], [], []>} : vector<2x32xf32>, vector<32x128xf32>, vector<2x128xf32> -> vector<2x128xf32>
    %147 = arith.addf %145, %146 : vector<2x128xf32>
    %148 = arith.negf %147 : vector<2x128xf32>
    %149 = math.exp %148 : vector<2x128xf32>
    %cst_25 = arith.constant 1.000000e+00 : f32
    %150 = vector.broadcast %cst_25 : f32 to vector<2x128xf32>
    %151 = arith.addf %150, %149 : vector<2x128xf32>
    %152 = arith.divf %150, %151 : vector<2x128xf32>
    %153 = math.tanh %147 : vector<2x128xf32>
    %154 = vector.extract_strided_slice %152 {offsets = [0, 0], sizes = [2, 32], strides = [1, 1]} : vector<2x128xf32> to vector<2x32xf32>
    %155 = vector.extract_strided_slice %152 {offsets = [0, 32], sizes = [2, 32], strides = [1, 1]} : vector<2x128xf32> to vector<2x32xf32>
    %156 = vector.extract_strided_slice %153 {offsets = [0, 64], sizes = [2, 32], strides = [1, 1]} : vector<2x128xf32> to vector<2x32xf32>
    %157 = vector.extract_strided_slice %152 {offsets = [0, 96], sizes = [2, 32], strides = [1, 1]} : vector<2x128xf32> to vector<2x32xf32>
    %158 = arith.mulf %155, %141 : vector<2x32xf32>
    %159 = arith.mulf %154, %156 : vector<2x32xf32>
    %160 = arith.addf %158, %159 : vector<2x32xf32>
    %161 = math.tanh %160 : vector<2x32xf32>
    %162 = arith.mulf %157, %161 : vector<2x32xf32>
    %163 = tpu.concatenate %29, %48, %67, %86, %105, %124, %143, %162 in 1 : vector<2x32xf32>, vector<2x32xf32>, vector<2x32xf32>, vector<2x32xf32>, vector<2x32xf32>, vector<2x32xf32>, vector<2x32xf32>, vector<2x32xf32> -> vector<2x256xf32>
    %c0_26 = arith.constant 0 : index
    %c0_27 = arith.constant 0 : index
    %164 = vector.load %arg4[%c0_26, %c0_27] : memref<256x128xf32, #tpu.memory_space<vmem>>, vector<256x128xf32>
    %cst_28 = arith.constant dense<0.000000e+00> : vector<2x128xf32>
    %165 = tpu.matmul %163, %164, %cst_28 {dimension_numbers = #tpu.dot_dimension_numbers<[1], [0], [0], [1], [0, 0, 1, 1], [], []>} : vector<2x256xf32>, vector<256x128xf32>, vector<2x128xf32> -> vector<2x128xf32>
    %c0_29 = arith.constant 0 : index
    %c0_30 = arith.constant 0 : index
    %166 = vector.load %arg5[%c0_29, %c0_30] : memref<1x128xf32, #tpu.memory_space<vmem>>, vector<1x128xf32>
    %167 = vector.broadcast %166 : vector<1x128xf32> to vector<2x128xf32>
    %168 = arith.addf %165, %167 : vector<2x128xf32>
    %c0_31 = arith.constant 0 : index
    %c0_32 = arith.constant 0 : index
    %169 = vector.load %arg6[%c0_31, %c0_32] : memref<2x128xf32, #tpu.memory_space<vmem>>, vector<2x128xf32>
    tpu.vector_store %arg6[%c0_31, %c0_32], %168 {strides = array<i32>} : memref<2x128xf32, #tpu.memory_space<vmem>>, vector<2x128xf32>,
    return
  }
}

</mosaic_0001>

<llo_original>
// kernel: tpu_custom_call.1
$region0: #{tpu_custom_call.1}
  #allocation0 [shape = 'u32[]', space=smem, size = 0x4, offset = 0x4, fixed_abs, tag = 'smem constant byte address 0x4 - core index']
  #allocation1 [shape = 'u32[72,128]{1,0:T(1,128)}', space=vmem, size = 0x9000, scoped, tag = 'internal scratch']
  %s0 = inlined_call_operand.hbm [shape: f32[2,8,16], index: 0, kind: input, shape index: {}]
  %s1 = inlined_call_operand.hbm [shape: f32[16,128], index: 1, kind: input, shape index: {}]
  %s2 = inlined_call_operand.hbm [shape: f32[32,128], index: 2, kind: input, shape index: {}]
  %s3 = inlined_call_operand.vmem [shape: f32[1,128], index: 3, kind: input, shape index: {}]
  %s4 = inlined_call_operand.hbm [shape: f32[256,128], index: 4, kind: input, shape index: {}]
  %s5 = inlined_call_operand.vmem [shape: f32[1,128], index: 5, kind: input, shape index: {}]
  %s6 = inlined_call_operand.hbm [shape: f32[2,128], index: 6, kind: output, shape index: {}]
  %s7 = sld [smem:[#allocation0]]
  $region50: #{tpu_custom_call.1} parent=0
    _
  %s9 = ssub.s32 1, %s7
  %s10 = scalar_select 0, %s9, %s7
  $region1: #{tpu_custom_call.1} parent=0
    #allocation2 [shape = 'u8[8192]{0}', space=vmem, size = 0x2000, scoped, tag = 'input window, operand 0, single buffered']
    #allocation3 [shape = 's32[1]{0}', space=sflag, size = 0x4, scoped, tag = 'scoped memory for tpu_custom_call.1']
    #allocation4 [shape = 's32[1]{0}', space=sflag, size = 0x4, scoped, tag = 'scoped memory for tpu_custom_call.1']
    #allocation5 [shape = 'u8[8192]{0}', space=vmem, size = 0x2000, scoped, tag = 'input window, operand 1, single buffered']
    #allocation6 [shape = 's32[1]{0}', space=sflag, size = 0x4, scoped, tag = 'scoped memory for tpu_custom_call.1']
    #allocation7 [shape = 'u8[16384]{0}', space=vmem, size = 0x4000, scoped, tag = 'input window, operand 2, single buffered']
    #allocation8 [shape = 'u8[131072]{0}', space=vmem, size = 0x20000, scoped, tag = 'input window, operand 4, single buffered']
    #allocation9 [shape = 's32[1]{0}', space=sflag, size = 0x4, scoped, tag = 'scoped memory for tpu_custom_call.1']
    #allocation10 [shape = 'u8[1024]{0}', space=vmem, size = 0x400, scoped, tag = 'output window, operand 0, single buffered']
    %11 = vsyncpa [#allocation3], 0
    %12 = vsyncpa [#allocation6], 0
    %13 = vsyncpa [#allocation9], 0
    %14 = vsyncpa [#allocation4], 0
    // Predicated region
    $region2: #{tpu_custom_call.1} parent=1 // pred_check
      _
    $region3: #{tpu_custom_call.1} parent=1 // pred_check_branch
      %16 = sbr.rel (0) target = $region5
    $region4: #{tpu_custom_call.1} parent=1 // pred_region
      %18 = vsyncadd [#allocation3], 0
      %s19 = sshll.u32 %s0, 4
      %s20 = int_to_ptr.hbm [resolvable:$true] %s19
      %s21 = sshll.u32 [#allocation2], 4
      %s22 = int_to_ptr.vmem [resolvable:$true] %s21
      %27 = dma.hbm_to_vmem [thread:$0]  %s20, 256, %s22, [#allocation3], 128, 128, 8
    $region5: #{tpu_custom_call.1} parent=1 // pred_fallthru
      _
    // Predicated region
    $region6: #{tpu_custom_call.1} parent=1 // pred_check
      _
    $region7: #{tpu_custom_call.1} parent=1 // pred_check_branch
      %29 = sbr.rel (0) target = $region9
    $region8: #{tpu_custom_call.1} parent=1 // pred_region
      %31 = vsyncadd [#allocation6], 0
      %s32 = sshll.u32 %s1, 4
      %s33 = int_to_ptr.hbm [resolvable:$true] %s32
      %s34 = sshll.u32 [#allocation5], 4
      %s35 = int_to_ptr.vmem [resolvable:$true] %s34
      %40 = dma.hbm_to_vmem [thread:$0]  %s33, 256, %s35, [#allocation6], 128, 128, 8
    $region9: #{tpu_custom_call.1} parent=1 // pred_fallthru
      _
    // Predicated region
    $region10: #{tpu_custom_call.1} parent=1 // pred_check
      _
    $region11: #{tpu_custom_call.1} parent=1 // pred_check_branch
      %42 = sbr.rel (0) target = $region13
    $region12: #{tpu_custom_call.1} parent=1 // pred_region
      %44 = vsyncadd [#allocation6], 0
      %s45 = sshll.u32 %s2, 4
      %s46 = int_to_ptr.hbm [resolvable:$true] %s45
      %s47 = sshll.u32 [#allocation7], 4
      %s48 = int_to_ptr.vmem [resolvable:$true] %s47
      %53 = dma.hbm_to_vmem [thread:$0]  %s46, 512, %s48, [#allocation6], 128, 128, 8
    $region13: #{tpu_custom_call.1} parent=1 // pred_fallthru
      _
    // Predicated region
    $region14: #{tpu_custom_call.1} parent=1 // pred_check
      _
    $region15: #{tpu_custom_call.1} parent=1 // pred_check_branch
      %55 = sbr.rel (0) target = $region17
    $region16: #{tpu_custom_call.1} parent=1 // pred_region
      _
    $region17: #{tpu_custom_call.1} parent=1 // pred_fallthru
      _
    // Predicated region
    $region18: #{tpu_custom_call.1} parent=1 // pred_check
      _
    $region19: #{tpu_custom_call.1} parent=1 // pred_check_branch
      %57 = sbr.rel (0) target = $region21
    $region20: #{tpu_custom_call.1} parent=1 // pred_region
      %59 = vsyncadd [#allocation9], 0
      %s60 = sshll.u32 %s4, 4
      %s61 = int_to_ptr.hbm [resolvable:$true] %s60
      %s62 = sshll.u32 [#allocation8], 4
      %s63 = int_to_ptr.vmem [resolvable:$true] %s62
      %68 = dma.hbm_to_vmem [thread:$0]  %s61, 4096, %s63, [#allocation9], 128, 128, 8
    $region21: #{tpu_custom_call.1} parent=1 // pred_fallthru
      _
    // Predicated region
    $region22: #{tpu_custom_call.1} parent=1 // pred_check
      _
    $region23: #{tpu_custom_call.1} parent=1 // pred_check_branch
      %70 = sbr.rel (0) target = $region25
    $region24: #{tpu_custom_call.1} parent=1 // pred_region
      _
    $region25: #{tpu_custom_call.1} parent=1 // pred_fallthru
      _
    // Predicated region
    $region26: #{tpu_custom_call.1} parent=1 // pred_check
      _
    $region27: #{tpu_custom_call.1} parent=1 // pred_check_branch
      %72 = sbr.rel (0) target = $region29
    $region28: #{tpu_custom_call.1} parent=1 // pred_region
      %74 = dma.done [#allocation3], 256
    $region29: #{tpu_custom_call.1} parent=1 // pred_fallthru
      _
    // Predicated region
    $region30: #{tpu_custom_call.1} parent=1 // pred_check
      _
    $region31: #{tpu_custom_call.1} parent=1 // pred_check_branch
      %76 = sbr.rel (0) target = $region33
    $region32: #{tpu_custom_call.1} parent=1 // pred_region
      %78 = dma.done [#allocation6], 256
    $region33: #{tpu_custom_call.1} parent=1 // pred_fallthru
      _
    // Predicated region
    $region34: #{tpu_custom_call.1} parent=1 // pred_check
      _
    $region35: #{tpu_custom_call.1} parent=1 // pred_check_branch
      %80 = sbr.rel (0) target = $region37
    $region36: #{tpu_custom_call.1} parent=1 // pred_region
      %82 = dma.done [#allocation6], 512
    $region37: #{tpu_custom_call.1} parent=1 // pred_fallthru
      _
    // Predicated region
    $region38: #{tpu_custom_call.1} parent=1 // pred_check
      _
    $region39: #{tpu_custom_call.1} parent=1 // pred_check_branch
      %84 = sbr.rel (0) target = $region41
    $region40: #{tpu_custom_call.1} parent=1 // pred_region
      %86 = dma.done [#allocation9], 4096
    $region41: #{tpu_custom_call.1} parent=1 // pred_fallthru
      _
    %v87 = vld [vmem:[#allocation2] sm:$0xff]
    %v88 = vld [vmem:[#allocation2 + $0x8] sm:$0xff]
    %v89 = vld [vmem:[#allocation5] sm:$0xff]
    %v90 = vld [vmem:[#allocation5 + $0x8] sm:$0xff]
    %v91 = vld [vmem:[%s3] sm:$0x1]
    %v93 = vperm.slane %v91, 0
    %vm95 = vcmask 130048
    %v97 = vsel %vm95, %v87, 0
    %v100 = vsel %vm95, %v88, 0
    %102 = vmatpush.msra.mxu0 0.0
    %103 = vmatpush.msra.mxu0 0.0
    %104 = vmatpush.msra.mxu0 0.0
    %105 = vmatpush.msra.mxu0 0.0
    %106 = vmatpush.msra.mxu0 0.0
    %107 = vmatpush.msra.mxu0 0.0
    %108 = vmatpush.msra.mxu0 0.0
    %109 = vmatpush.msra.mxu0 0.0
    %110 = vmatpush.msra.mxu0 0.0
    %111 = vmatpush.msra.mxu0 0.0
    %112 = vmatpush.msra.mxu0 0.0
    %113 = vmatpush.msra.mxu0 0.0
    %114 = vmatpush.msra.mxu0 0.0
    %115 = vmatpush.msra.mxu0 0.0
    %116 = vmatpush.msra.mxu0 %v90
    %117 = vmatpush.msra.mxu0 %v89
    %118 = vmatmul.f32.gmra.mxu0 %v97
    %v119 = vpop.f32.mrf.mxu0
    %v120 = vadd.f32 %v93, %v119
    %121 = vmatmul.f32.gmra.mxu0 %v100
    %v122 = vpop.f32.mrf.mxu0
    %v123 = vadd.f32 %v93, %v122
    %124 = vdwg.mxu0
    %v125 = vld [vmem:[#allocation7] sm:$0xff]
    %v126 = vld [vmem:[#allocation7 + $0x8] sm:$0xff]
    %v127 = vld [vmem:[#allocation7 + $0x10] sm:$0xff]
    %v128 = vld [vmem:[#allocation7 + $0x18] sm:$0xff]
    %vm129 = vcmask 261120
    %v131 = vsel %vm129, 0.0, 0
    %133 = vmatpush.msra.mxu0 0.0
    %134 = vmatpush.msra.mxu0 0.0
    %135 = vmatpush.msra.mxu0 0.0
    %136 = vmatpush.msra.mxu0 0.0
    %137 = vmatpush.msra.mxu0 0.0
    %138 = vmatpush.msra.mxu0 0.0
    %139 = vmatpush.msra.mxu0 0.0
    %140 = vmatpush.msra.mxu0 0.0
    %141 = vmatpush.msra.mxu0 0.0
    %142 = vmatpush.msra.mxu0 0.0
    %143 = vmatpush.msra.mxu0 0.0
    %144 = vmatpush.msra.mxu0 0.0
    %145 = vmatpush.msra.mxu0 %v128
    %146 = vmatpush.msra.mxu0 %v127
    %147 = vmatpush.msra.mxu0 %v126
    %148 = vmatpush.msra.mxu0 %v125
    %149 = vmatmul.f32.gmra.mxu0 %v131
    %v150 = vpop.f32.mrf.mxu0
    %v151 = vadd.f32 0.0, %v150
    %152 = vdwg.mxu0
    %v154 = vrot.slane %v151, 1
    %v157 = vadd.f32 %v120, %v151
    %v158 = vadd.f32 %v123, %v154
    %v159 = vxor.u32 %v157, 2147483648
    %v160 = vxor.u32 %v158, 2147483648
    %v161 = vmul.f32 %v159, 1.442695
    %v162 = vpow.pop %v161
    %v163 = vmul.f32 %v160, 1.442695
    %v164 = vpow.pop %v163
    %v165 = vadd.f32 %v162, 1.0
    %v166 = vadd.f32 %v164, 1.0
    %v167 = vrcp.pop %v165
    %v168 = vmul.f32 %v165, %v167
    %v169 = vsub.f32 1.0, %v168
    %v170 = vmul.f32 %v167, %v169
    %v171 = vadd.f32 %v167, %v170
    %vm172 = vweird.f32 %v165
    %vm173 = vweird.f32 %v167
    %vm174 = vmor %vm172, %vm173
    %v175 = vsel %vm174, %v167, %v171
    %v176 = vand.u32 2147483647, %v165
    %vm177 = vcmp.eq.f32.partialorder %v176, 8.507059e+37
    %v178 = vand.u32 %v165, 2147483648
    %v179 = vor.u32 1.1754944e-38, %v178
    %v180 = vsel %vm177, %v179, %v175
    %v181 = vmul.f32 1.0, %v180
    %v182 = vrcp.pop %v166
    %v183 = vmul.f32 %v166, %v182
    %v184 = vsub.f32 1.0, %v183
    %v185 = vmul.f32 %v182, %v184
    %v186 = vadd.f32 %v182, %v185
    %vm187 = vweird.f32 %v166
    %vm188 = vweird.f32 %v182
    %vm189 = vmor %vm187, %vm188
    %v190 = vsel %vm189, %v182, %v186
    %v191 = vand.u32 2147483647, %v166
    %vm192 = vcmp.eq.f32.partialorder %v191, 8.507059e+37
    %v193 = vand.u32 %v166, 2147483648
    %v194 = vor.u32 1.1754944e-38, %v193
    %v195 = vsel %vm192, %v194, %v190
    %v196 = vmul.f32 1.0, %v195
    %v197 = vtanh.pop %v157
    %v198 = vtanh.pop %v158
    %v199 = vmul.f32 %v181, 0.0
    %v200 = vmul.f32 %v196, 0.0
    %203 = vrot.lane.b32.xlu0 %v197, 64
    %v204 = vpop.permute.xlu0 %203
    %205 = vrot.lane.b32.xlu0 %v198, 64
    %v206 = vpop.permute.xlu0 %205
    %v209 = vmul.f32 %v181, %v204
    %v210 = vmul.f32 %v196, %v206
    %213 = vrot.lane.b32.xlu0 %v209, 32
    %v214 = vpop.permute.xlu0 %213
    %215 = vrot.lane.b32.xlu0 %v210, 32
    %v216 = vpop.permute.xlu0 %215
    %v219 = vadd.f32 %v199, %v214
    %v220 = vadd.f32 %v200, %v216
    %v221 = vtanh.pop %v219
    %v222 = vtanh.pop %v220
    %225 = vrot.lane.b32.xlu0 %v221, 64
    %v226 = vpop.permute.xlu0 %225
    %227 = vrot.lane.b32.xlu0 %v222, 64
    %v228 = vpop.permute.xlu0 %227
    %v231 = vmul.f32 %v181, %v226
    %v232 = vmul.f32 %v196, %v228
    %v235 = vrot.slane %v232, 7
    %vm236 = vcmask 1041409
    %v237 = vsel %vm236, %v235, %v231
    %238 = vrot.lane.b32.xlu0 %v237, 32
    %v239 = vpop.permute.xlu0 %238
    %v240 = vsel %vm129, %v239, 0
    %242 = vmatpush.msra.mxu0 0.0
    %243 = vmatpush.msra.mxu0 0.0
    %244 = vmatpush.msra.mxu0 0.0
    %245 = vmatpush.msra.mxu0 0.0
    %246 = vmatpush.msra.mxu0 0.0
    %247 = vmatpush.msra.mxu0 0.0
    %248 = vmatpush.msra.mxu0 0.0
    %249 = vmatpush.msra.mxu0 0.0
    %250 = vmatpush.msra.mxu0 0.0
    %251 = vmatpush.msra.mxu0 0.0
    %252 = vmatpush.msra.mxu0 0.0
    %253 = vmatpush.msra.mxu0 0.0
    %254 = vmatpush.msra.mxu0 %v128
    %255 = vmatpush.msra.mxu0 %v127
    %256 = vmatpush.msra.mxu0 %v126
    %257 = vmatpush.msra.mxu0 %v125
    %258 = vmatmul.f32.gmra.mxu0 %v240
    %v259 = vpop.f32.mrf.mxu0
    %v260 = vadd.f32 0.0, %v259
    %261 = vdwg.mxu0
    %v263 = vrot.slane %v260, 7
    %v266 = vadd.f32 %v120, %v263
    %v267 = vadd.f32 %v123, %v260
    %v268 = vxor.u32 %v266, 2147483648
    %v269 = vxor.u32 %v267, 2147483648
    %v270 = vmul.f32 %v268, 1.442695
    %v271 = vpow.pop %v270
    %v272 = vmul.f32 %v269, 1.442695
    %v273 = vpow.pop %v272
    %v274 = vadd.f32 %v271, 1.0
    %v275 = vadd.f32 %v273, 1.0
    %v276 = vrcp.pop %v274
    %v277 = vmul.f32 %v274, %v276
    %v278 = vsub.f32 1.0, %v277
    %v279 = vmul.f32 %v276, %v278
    %v280 = vadd.f32 %v276, %v279
    %vm281 = vweird.f32 %v274
    %vm282 = vweird.f32 %v276
    %vm283 = vmor %vm281, %vm282
    %v284 = vsel %vm283, %v276, %v280
    %v285 = vand.u32 2147483647, %v274
    %vm286 = vcmp.eq.f32.partialorder %v285, 8.507059e+37
    %v287 = vand.u32 %v274, 2147483648
    %v288 = vor.u32 1.1754944e-38, %v287
    %v289 = vsel %vm286, %v288, %v284
    %v290 = vmul.f32 1.0, %v289
    %v291 = vrcp.pop %v275
    %v292 = vmul.f32 %v275, %v291
    %v293 = vsub.f32 1.0, %v292
    %v294 = vmul.f32 %v291, %v293
    %v295 = vadd.f32 %v291, %v294
    %vm296 = vweird.f32 %v275
    %vm297 = vweird.f32 %v291
    %vm298 = vmor %vm296, %vm297
    %v299 = vsel %vm298, %v291, %v295
    %v300 = vand.u32 2147483647, %v275
    %vm301 = vcmp.eq.f32.partialorder %v300, 8.507059e+37
    %v302 = vand.u32 %v275, 2147483648
    %v303 = vor.u32 1.1754944e-38, %v302
    %v304 = vsel %vm301, %v303, %v299
    %v305 = vmul.f32 1.0, %v304
    %v306 = vtanh.pop %v266
    %v307 = vtanh.pop %v267
    %v310 = vrot.slane %v219, 7
    %v311 = vrot.slane %v220, 7
    %v314 = vmul.f32 %v290, %v310
    %v315 = vmul.f32 %v305, %v311
    %318 = vrot.lane.b32.xlu0 %v306, 64
    %v319 = vpop.permute.xlu0 %318
    %320 = vrot.lane.b32.xlu0 %v307, 64
    %v321 = vpop.permute.xlu0 %320
    %v324 = vmul.f32 %v290, %v319
    %v325 = vmul.f32 %v305, %v321
    %328 = vrot.lane.b32.xlu0 %v324, 32
    %v329 = vpop.permute.xlu0 %328
    %330 = vrot.lane.b32.xlu0 %v325, 32
    %v331 = vpop.permute.xlu0 %330
    %v334 = vadd.f32 %v314, %v329
    %v335 = vadd.f32 %v315, %v331
    %v336 = vtanh.pop %v334
    %v337 = vtanh.pop %v335
    %340 = vrot.lane.b32.xlu0 %v336, 64
    %v341 = vpop.permute.xlu0 %340
    %342 = vrot.lane.b32.xlu0 %v337, 64
    %v343 = vpop.permute.xlu0 %342
    %v346 = vmul.f32 %v290, %v341
    %v347 = vmul.f32 %v305, %v343
    %v350 = vrot.slane %v346, 1
    %v351 = vsel %vm236, %v347, %v350
    %352 = vrot.lane.b32.xlu0 %v351, 32
    %v353 = vpop.permute.xlu0 %352
    %v354 = vsel %vm129, %v353, 0
    %356 = vmatpush.msra.mxu0 0.0
    %357 = vmatpush.msra.mxu0 0.0
    %358 = vmatpush.msra.mxu0 0.0
    %359 = vmatpush.msra.mxu0 0.0
    %360 = vmatpush.msra.mxu0 0.0
    %361 = vmatpush.msra.mxu0 0.0
    %362 = vmatpush.msra.mxu0 0.0
    %363 = vmatpush.msra.mxu0 0.0
    %364 = vmatpush.msra.mxu0 0.0
    %365 = vmatpush.msra.mxu0 0.0
    %366 = vmatpush.msra.mxu0 0.0
    %367 = vmatpush.msra.mxu0 0.0
    %368 = vmatpush.msra.mxu0 %v128
    %369 = vmatpush.msra.mxu0 %v127
    %370 = vmatpush.msra.mxu0 %v126
    %371 = vmatpush.msra.mxu0 %v125
    %372 = vmatmul.f32.gmra.mxu0 %v354
    %v373 = vpop.f32.mrf.mxu0
    %v374 = vadd.f32 0.0, %v373
    %375 = vdwg.mxu0
    %v377 = vrot.slane %v374, 6
    %v378 = vrot.slane %v374, 7
    %v381 = vadd.f32 %v120, %v377
    %v382 = vadd.f32 %v123, %v378
    %v383 = vxor.u32 %v381, 2147483648
    %v384 = vxor.u32 %v382, 2147483648
    %v385 = vmul.f32 %v383, 1.442695
    %v386 = vpow.pop %v385
    %v387 = vmul.f32 %v384, 1.442695
    %v388 = vpow.pop %v387
    %v389 = vadd.f32 %v386, 1.0
    %v390 = vadd.f32 %v388, 1.0
    %v391 = vrcp.pop %v389
    %v392 = vmul.f32 %v389, %v391
    %v393 = vsub.f32 1.0, %v392
    %v394 = vmul.f32 %v391, %v393
    %v395 = vadd.f32 %v391, %v394
    %vm396 = vweird.f32 %v389
    %vm397 = vweird.f32 %v391
    %vm398 = vmor %vm396, %vm397
    %v399 = vsel %vm398, %v391, %v395
    %v400 = vand.u32 2147483647, %v389
    %vm401 = vcmp.eq.f32.partialorder %v400, 8.507059e+37
    %v402 = vand.u32 %v389, 2147483648
    %v403 = vor.u32 1.1754944e-38, %v402
    %v404 = vsel %vm401, %v403, %v399
    %v405 = vmul.f32 1.0, %v404
    %v406 = vrcp.pop %v390
    %v407 = vmul.f32 %v390, %v406
    %v408 = vsub.f32 1.0, %v407
    %v409 = vmul.f32 %v406, %v408
    %v410 = vadd.f32 %v406, %v409
    %vm411 = vweird.f32 %v390
    %vm412 = vweird.f32 %v406
    %vm413 = vmor %vm411, %vm412
    %v414 = vsel %vm413, %v406, %v410
    %v415 = vand.u32 2147483647, %v390
    %vm416 = vcmp.eq.f32.partialorder %v415, 8.507059e+37
    %v417 = vand.u32 %v390, 2147483648
    %v418 = vor.u32 1.1754944e-38, %v417
    %v419 = vsel %vm416, %v418, %v414
    %v420 = vmul.f32 1.0, %v419
    %v421 = vtanh.pop %v381
    %v422 = vtanh.pop %v382
    %v425 = vrot.slane %v334, 7
    %v426 = vrot.slane %v335, 7
    %v429 = vmul.f32 %v405, %v425
    %v430 = vmul.f32 %v420, %v426
    %433 = vrot.lane.b32.xlu0 %v421, 64
    %v434 = vpop.permute.xlu0 %433
    %435 = vrot.lane.b32.xlu0 %v422, 64
    %v436 = vpop.permute.xlu0 %435
    %v439 = vmul.f32 %v405, %v434
    %v440 = vmul.f32 %v420, %v436
    %443 = vrot.lane.b32.xlu0 %v439, 32
    %v444 = vpop.permute.xlu0 %443
    %445 = vrot.lane.b32.xlu0 %v440, 32
    %v446 = vpop.permute.xlu0 %445
    %v449 = vadd.f32 %v429, %v444
    %v450 = vadd.f32 %v430, %v446
    %v451 = vtanh.pop %v449
    %v452 = vtanh.pop %v450
    %455 = vrot.lane.b32.xlu0 %v451, 64
    %v456 = vpop.permute.xlu0 %455
    %457 = vrot.lane.b32.xlu0 %v452, 64
    %v458 = vpop.permute.xlu0 %457
    %v461 = vmul.f32 %v405, %v456
    %v462 = vmul.f32 %v420, %v458
    %v465 = vrot.slane %v461, 2
    %v466 = vrot.slane %v462, 1
    %v467 = vsel %vm236, %v466, %v465
    %468 = vrot.lane.b32.xlu0 %v467, 32
    %v469 = vpop.permute.xlu0 %468
    %v470 = vsel %vm129, %v469, 0
    %472 = vmatpush.msra.mxu0 0.0
    %473 = vmatpush.msra.mxu0 0.0
    %474 = vmatpush.msra.mxu0 0.0
    %475 = vmatpush.msra.mxu0 0.0
    %476 = vmatpush.msra.mxu0 0.0
    %477 = vmatpush.msra.mxu0 0.0
    %478 = vmatpush.msra.mxu0 0.0
    %479 = vmatpush.msra.mxu0 0.0
    %480 = vmatpush.msra.mxu0 0.0
    %481 = vmatpush.msra.mxu0 0.0
    %482 = vmatpush.msra.mxu0 0.0
    %483 = vmatpush.msra.mxu0 0.0
    %484 = vmatpush.msra.mxu0 %v128
    %485 = vmatpush.msra.mxu0 %v127
    %486 = vmatpush.msra.mxu0 %v126
    %487 = vmatpush.msra.mxu0 %v125
    %488 = vmatmul.f32.gmra.mxu0 %v470
    %v489 = vpop.f32.mrf.mxu0
    %v490 = vadd.f32 0.0, %v489
    %491 = vdwg.mxu0
    %v493 = vrot.slane %v490, 5
    %v494 = vrot.slane %v490, 6
    %v497 = vadd.f32 %v120, %v493
    %v498 = vadd.f32 %v123, %v494
    %v499 = vxor.u32 %v497, 2147483648
    %v500 = vxor.u32 %v498, 2147483648
    %v501 = vmul.f32 %v499, 1.442695
    %v502 = vpow.pop %v501
    %v503 = vmul.f32 %v500, 1.442695
    %v504 = vpow.pop %v503
    %v505 = vadd.f32 %v502, 1.0
    %v506 = vadd.f32 %v504, 1.0
    %v507 = vrcp.pop %v505
    %v508 = vmul.f32 %v505, %v507
    %v509 = vsub.f32 1.0, %v508
    %v510 = vmul.f32 %v507, %v509
    %v511 = vadd.f32 %v507, %v510
    %vm512 = vweird.f32 %v505
    %vm513 = vweird.f32 %v507
    %vm514 = vmor %vm512, %vm513
    %v515 = vsel %vm514, %v507, %v511
    %v516 = vand.u32 2147483647, %v505
    %vm517 = vcmp.eq.f32.partialorder %v516, 8.507059e+37
    %v518 = vand.u32 %v505, 2147483648
    %v519 = vor.u32 1.1754944e-38, %v518
    %v520 = vsel %vm517, %v519, %v515
    %v521 = vmul.f32 1.0, %v520
    %v522 = vrcp.pop %v506
    %v523 = vmul.f32 %v506, %v522
    %v524 = vsub.f32 1.0, %v523
    %v525 = vmul.f32 %v522, %v524
    %v526 = vadd.f32 %v522, %v525
    %vm527 = vweird.f32 %v506
    %vm528 = vweird.f32 %v522
    %vm529 = vmor %vm527, %vm528
    %v530 = vsel %vm529, %v522, %v526
    %v531 = vand.u32 2147483647, %v506
    %vm532 = vcmp.eq.f32.partialorder %v531, 8.507059e+37
    %v533 = vand.u32 %v506, 2147483648
    %v534 = vor.u32 1.1754944e-38, %v533
    %v535 = vsel %vm532, %v534, %v530
    %v536 = vmul.f32 1.0, %v535
    %v537 = vtanh.pop %v497
    %v538 = vtanh.pop %v498
    %v541 = vrot.slane %v449, 7
    %v542 = vrot.slane %v450, 7
    %v545 = vmul.f32 %v521, %v541
    %v546 = vmul.f32 %v536, %v542
    %549 = vrot.lane.b32.xlu0 %v537, 64
    %v550 = vpop.permute.xlu0 %549
    %551 = vrot.lane.b32.xlu0 %v538, 64
    %v552 = vpop.permute.xlu0 %551
    %v555 = vmul.f32 %v521, %v550
    %v556 = vmul.f32 %v536, %v552
    %559 = vrot.lane.b32.xlu0 %v555, 32
    %v560 = vpop.permute.xlu0 %559
    %561 = vrot.lane.b32.xlu0 %v556, 32
    %v562 = vpop.permute.xlu0 %561
    %v565 = vadd.f32 %v545, %v560
    %v566 = vadd.f32 %v546, %v562
    %v567 = vtanh.pop %v565
    %v568 = vtanh.pop %v566
    %571 = vrot.lane.b32.xlu0 %v567, 64
    %v572 = vpop.permute.xlu0 %571
    %573 = vrot.lane.b32.xlu0 %v568, 64
    %v574 = vpop.permute.xlu0 %573
    %v577 = vmul.f32 %v521, %v572
    %v578 = vmul.f32 %v536, %v574
    %v581 = vrot.slane %v577, 3
    %v582 = vrot.slane %v578, 2
    %v583 = vsel %vm236, %v582, %v581
    %584 = vrot.lane.b32.xlu0 %v583, 32
    %v585 = vpop.permute.xlu0 %584
    %v586 = vsel %vm129, %v585, 0
    %588 = vmatpush.msra.mxu0 0.0
    %589 = vmatpush.msra.mxu0 0.0
    %590 = vmatpush.msra.mxu0 0.0
    %591 = vmatpush.msra.mxu0 0.0
    %592 = vmatpush.msra.mxu0 0.0
    %593 = vmatpush.msra.mxu0 0.0
    %594 = vmatpush.msra.mxu0 0.0
    %595 = vmatpush.msra.mxu0 0.0
    %596 = vmatpush.msra.mxu0 0.0
    %597 = vmatpush.msra.mxu0 0.0
    %598 = vmatpush.msra.mxu0 0.0
    %599 = vmatpush.msra.mxu0 0.0
    %600 = vmatpush.msra.mxu0 %v128
    %601 = vmatpush.msra.mxu0 %v127
    %602 = vmatpush.msra.mxu0 %v126
    %603 = vmatpush.msra.mxu0 %v125
    %604 = vmatmul.f32.gmra.mxu0 %v586
    %v605 = vpop.f32.mrf.mxu0
    %v606 = vadd.f32 0.0, %v605
    %607 = vdwg.mxu0
    %v609 = vrot.slane %v606, 4
    %v610 = vrot.slane %v606, 5
    %v613 = vadd.f32 %v120, %v609
    %v614 = vadd.f32 %v123, %v610
    %v615 = vxor.u32 %v613, 2147483648
    %v616 = vxor.u32 %v614, 2147483648
    %v617 = vmul.f32 %v615, 1.442695
    %v618 = vpow.pop %v617
    %v619 = vmul.f32 %v616, 1.442695
    %v620 = vpow.pop %v619
    %v621 = vadd.f32 %v618, 1.0
    %v622 = vadd.f32 %v620, 1.0
    %v623 = vrcp.pop %v621
    %v624 = vmul.f32 %v621, %v623
    %v625 = vsub.f32 1.0, %v624
    %v626 = vmul.f32 %v623, %v625
    %v627 = vadd.f32 %v623, %v626
    %vm628 = vweird.f32 %v621
    %vm629 = vweird.f32 %v623
    %vm630 = vmor %vm628, %vm629
    %v631 = vsel %vm630, %v623, %v627
    %v632 = vand.u32 2147483647, %v621
    %vm633 = vcmp.eq.f32.partialorder %v632, 8.507059e+37
    %v634 = vand.u32 %v621, 2147483648
    %v635 = vor.u32 1.1754944e-38, %v634
    %v636 = vsel %vm633, %v635, %v631
    %v637 = vmul.f32 1.0, %v636
    %v638 = vrcp.pop %v622
    %v639 = vmul.f32 %v622, %v638
    %v640 = vsub.f32 1.0, %v639
    %v641 = vmul.f32 %v638, %v640
    %v642 = vadd.f32 %v638, %v641
    %vm643 = vweird.f32 %v622
    %vm644 = vweird.f32 %v638
    %vm645 = vmor %vm643, %vm644
    %v646 = vsel %vm645, %v638, %v642
    %v647 = vand.u32 2147483647, %v622
    %vm648 = vcmp.eq.f32.partialorder %v647, 8.507059e+37
    %v649 = vand.u32 %v622, 2147483648
    %v650 = vor.u32 1.1754944e-38, %v649
    %v651 = vsel %vm648, %v650, %v646
    %v652 = vmul.f32 1.0, %v651
    %v653 = vtanh.pop %v613
    %v654 = vtanh.pop %v614
    %v657 = vrot.slane %v565, 7
    %v658 = vrot.slane %v566, 7
    %v661 = vmul.f32 %v637, %v657
    %v662 = vmul.f32 %v652, %v658
    %665 = vrot.lane.b32.xlu0 %v653, 64
    %v666 = vpop.permute.xlu0 %665
    %667 = vrot.lane.b32.xlu0 %v654, 64
    %v668 = vpop.permute.xlu0 %667
    %v671 = vmul.f32 %v637, %v666
    %v672 = vmul.f32 %v652, %v668
    %675 = vrot.lane.b32.xlu0 %v671, 32
    %v676 = vpop.permute.xlu0 %675
    %677 = vrot.lane.b32.xlu0 %v672, 32
    %v678 = vpop.permute.xlu0 %677
    %v681 = vadd.f32 %v661, %v676
    %v682 = vadd.f32 %v662, %v678
    %v683 = vtanh.pop %v681
    %v684 = vtanh.pop %v682
    %687 = vrot.lane.b32.xlu0 %v683, 64
    %v688 = vpop.permute.xlu0 %687
    %689 = vrot.lane.b32.xlu0 %v684, 64
    %v690 = vpop.permute.xlu0 %689
    %v693 = vmul.f32 %v637, %v688
    %v694 = vmul.f32 %v652, %v690
    %v697 = vrot.slane %v693, 4
    %v698 = vrot.slane %v694, 3
    %v699 = vsel %vm236, %v698, %v697
    %700 = vrot.lane.b32.xlu0 %v699, 32
    %v701 = vpop.permute.xlu0 %700
    %v702 = vsel %vm129, %v701, 0
    %704 = vmatpush.msra.mxu0 0.0
    %705 = vmatpush.msra.mxu0 0.0
    %706 = vmatpush.msra.mxu0 0.0
    %707 = vmatpush.msra.mxu0 0.0
    %708 = vmatpush.msra.mxu0 0.0
    %709 = vmatpush.msra.mxu0 0.0
    %710 = vmatpush.msra.mxu0 0.0
    %711 = vmatpush.msra.mxu0 0.0
    %712 = vmatpush.msra.mxu0 0.0
    %713 = vmatpush.msra.mxu0 0.0
    %714 = vmatpush.msra.mxu0 0.0
    %715 = vmatpush.msra.mxu0 0.0
    %716 = vmatpush.msra.mxu0 %v128
    %717 = vmatpush.msra.mxu0 %v127
    %718 = vmatpush.msra.mxu0 %v126
    %719 = vmatpush.msra.mxu0 %v125
    %720 = vmatmul.f32.gmra.mxu0 %v702
    %v721 = vpop.f32.mrf.mxu0
    %v722 = vadd.f32 0.0, %v721
    %723 = vdwg.mxu0
    %v725 = vrot.slane %v722, 3
    %v726 = vrot.slane %v722, 4
    %v729 = vadd.f32 %v120, %v725
    %v730 = vadd.f32 %v123, %v726
    %v731 = vxor.u32 %v729, 2147483648
    %v732 = vxor.u32 %v730, 2147483648
    %v733 = vmul.f32 %v731, 1.442695
    %v734 = vpow.pop %v733
    %v735 = vmul.f32 %v732, 1.442695
    %v736 = vpow.pop %v735
    %v737 = vadd.f32 %v734, 1.0
    %v738 = vadd.f32 %v736, 1.0
    %v739 = vrcp.pop %v737
    %v740 = vmul.f32 %v737, %v739
    %v741 = vsub.f32 1.0, %v740
    %v742 = vmul.f32 %v739, %v741
    %v743 = vadd.f32 %v739, %v742
    %vm744 = vweird.f32 %v737
    %vm745 = vweird.f32 %v739
    %vm746 = vmor %vm744, %vm745
    %v747 = vsel %vm746, %v739, %v743
    %v748 = vand.u32 2147483647, %v737
    %vm749 = vcmp.eq.f32.partialorder %v748, 8.507059e+37
    %v750 = vand.u32 %v737, 2147483648
    %v751 = vor.u32 1.1754944e-38, %v750
    %v752 = vsel %vm749, %v751, %v747
    %v753 = vmul.f32 1.0, %v752
    %v754 = vrcp.pop %v738
    %v755 = vmul.f32 %v738, %v754
    %v756 = vsub.f32 1.0, %v755
    %v757 = vmul.f32 %v754, %v756
    %v758 = vadd.f32 %v754, %v757
    %vm759 = vweird.f32 %v738
    %vm760 = vweird.f32 %v754
    %vm761 = vmor %vm759, %vm760
    %v762 = vsel %vm761, %v754, %v758
    %v763 = vand.u32 2147483647, %v738
    %vm764 = vcmp.eq.f32.partialorder %v763, 8.507059e+37
    %v765 = vand.u32 %v738, 2147483648
    %v766 = vor.u32 1.1754944e-38, %v765
    %v767 = vsel %vm764, %v766, %v762
    %v768 = vmul.f32 1.0, %v767
    %v769 = vtanh.pop %v729
    %v770 = vtanh.pop %v730
    %v773 = vrot.slane %v681, 7
    %v774 = vrot.slane %v682, 7
    %v777 = vmul.f32 %v753, %v773
    %v778 = vmul.f32 %v768, %v774
    %781 = vrot.lane.b32.xlu0 %v769, 64
    %v782 = vpop.permute.xlu0 %781
    %783 = vrot.lane.b32.xlu0 %v770, 64
    %v784 = vpop.permute.xlu0 %783
    %v787 = vmul.f32 %v753, %v782
    %v788 = vmul.f32 %v768, %v784
    %791 = vrot.lane.b32.xlu0 %v787, 32
    %v792 = vpop.permute.xlu0 %791
    %793 = vrot.lane.b32.xlu0 %v788, 32
    %v794 = vpop.permute.xlu0 %793
    %v797 = vadd.f32 %v777, %v792
    %v798 = vadd.f32 %v778, %v794
    %v799 = vtanh.pop %v797
    %v800 = vtanh.pop %v798
    %803 = vrot.lane.b32.xlu0 %v799, 64
    %v804 = vpop.permute.xlu0 %803
    %805 = vrot.lane.b32.xlu0 %v800, 64
    %v806 = vpop.permute.xlu0 %805
    %v809 = vmul.f32 %v753, %v804
    %v810 = vmul.f32 %v768, %v806
    %v813 = vrot.slane %v809, 5
    %v814 = vrot.slane %v810, 4
    %v815 = vsel %vm236, %v814, %v813
    %816 = vrot.lane.b32.xlu0 %v815, 32
    %v817 = vpop.permute.xlu0 %816
    %v818 = vsel %vm129, %v817, 0
    %820 = vmatpush.msra.mxu0 0.0
    %821 = vmatpush.msra.mxu0 0.0
    %822 = vmatpush.msra.mxu0 0.0
    %823 = vmatpush.msra.mxu0 0.0
    %824 = vmatpush.msra.mxu0 0.0
    %825 = vmatpush.msra.mxu0 0.0
    %826 = vmatpush.msra.mxu0 0.0
    %827 = vmatpush.msra.mxu0 0.0
    %828 = vmatpush.msra.mxu0 0.0
    %829 = vmatpush.msra.mxu0 0.0
    %830 = vmatpush.msra.mxu0 0.0
    %831 = vmatpush.msra.mxu0 0.0
    %832 = vmatpush.msra.mxu0 %v128
    %833 = vmatpush.msra.mxu0 %v127
    %834 = vmatpush.msra.mxu0 %v126
    %835 = vmatpush.msra.mxu0 %v125
    %836 = vmatmul.f32.gmra.mxu0 %v818
    %v837 = vpop.f32.mrf.mxu0
    %v838 = vadd.f32 0.0, %v837
    %839 = vdwg.mxu0
    %v841 = vrot.slane %v838, 2
    %v842 = vrot.slane %v838, 3
    %v845 = vadd.f32 %v120, %v841
    %v846 = vadd.f32 %v123, %v842
    %v847 = vxor.u32 %v845, 2147483648
    %v848 = vxor.u32 %v846, 2147483648
    %v849 = vmul.f32 %v847, 1.442695
    %v850 = vpow.pop %v849
    %v851 = vmul.f32 %v848, 1.442695
    %v852 = vpow.pop %v851
    %v853 = vadd.f32 %v850, 1.0
    %v854 = vadd.f32 %v852, 1.0
    %v855 = vrcp.pop %v853
    %v856 = vmul.f32 %v853, %v855
    %v857 = vsub.f32 1.0, %v856
    %v858 = vmul.f32 %v855, %v857
    %v859 = vadd.f32 %v855, %v858
    %vm860 = vweird.f32 %v853
    %vm861 = vweird.f32 %v855
    %vm862 = vmor %vm860, %vm861
    %v863 = vsel %vm862, %v855, %v859
    %v864 = vand.u32 2147483647, %v853
    %vm865 = vcmp.eq.f32.partialorder %v864, 8.507059e+37
    %v866 = vand.u32 %v853, 2147483648
    %v867 = vor.u32 1.1754944e-38, %v866
    %v868 = vsel %vm865, %v867, %v863
    %v869 = vmul.f32 1.0, %v868
    %v870 = vrcp.pop %v854
    %v871 = vmul.f32 %v854, %v870
    %v872 = vsub.f32 1.0, %v871
    %v873 = vmul.f32 %v870, %v872
    %v874 = vadd.f32 %v870, %v873
    %vm875 = vweird.f32 %v854
    %vm876 = vweird.f32 %v870
    %vm877 = vmor %vm875, %vm876
    %v878 = vsel %vm877, %v870, %v874
    %v879 = vand.u32 2147483647, %v854
    %vm880 = vcmp.eq.f32.partialorder %v879, 8.507059e+37
    %v881 = vand.u32 %v854, 2147483648
    %v882 = vor.u32 1.1754944e-38, %v881
    %v883 = vsel %vm880, %v882, %v878
    %v884 = vmul.f32 1.0, %v883
    %v885 = vtanh.pop %v845
    %v886 = vtanh.pop %v846
    %v889 = vrot.slane %v797, 7
    %v890 = vrot.slane %v798, 7
    %v893 = vmul.f32 %v869, %v889
    %v894 = vmul.f32 %v884, %v890
    %897 = vrot.lane.b32.xlu0 %v885, 64
    %v898 = vpop.permute.xlu0 %897
    %899 = vrot.lane.b32.xlu0 %v886, 64
    %v900 = vpop.permute.xlu0 %899
    %v903 = vmul.f32 %v869, %v898
    %v904 = vmul.f32 %v884, %v900
    %907 = vrot.lane.b32.xlu0 %v903, 32
    %v908 = vpop.permute.xlu0 %907
    %909 = vrot.lane.b32.xlu0 %v904, 32
    %v910 = vpop.permute.xlu0 %909
    %v913 = vadd.f32 %v893, %v908
    %v914 = vadd.f32 %v894, %v910
    %v915 = vtanh.pop %v913
    %v916 = vtanh.pop %v914
    %919 = vrot.lane.b32.xlu0 %v915, 64
    %v920 = vpop.permute.xlu0 %919
    %921 = vrot.lane.b32.xlu0 %v916, 64
    %v922 = vpop.permute.xlu0 %921
    %v925 = vmul.f32 %v869, %v920
    %v926 = vmul.f32 %v884, %v922
    %v929 = vrot.slane %v925, 6
    %v930 = vrot.slane %v926, 5
    %v931 = vsel %vm236, %v930, %v929
    %932 = vrot.lane.b32.xlu0 %v931, 32
    %v933 = vpop.permute.xlu0 %932
    %v934 = vsel %vm129, %v933, 0
    %936 = vmatpush.msra.mxu0 0.0
    %937 = vmatpush.msra.mxu0 0.0
    %938 = vmatpush.msra.mxu0 0.0
    %939 = vmatpush.msra.mxu0 0.0
    %940 = vmatpush.msra.mxu0 0.0
    %941 = vmatpush.msra.mxu0 0.0
    %942 = vmatpush.msra.mxu0 0.0
    %943 = vmatpush.msra.mxu0 0.0
    %944 = vmatpush.msra.mxu0 0.0
    %945 = vmatpush.msra.mxu0 0.0
    %946 = vmatpush.msra.mxu0 0.0
    %947 = vmatpush.msra.mxu0 0.0
    %948 = vmatpush.msra.mxu0 %v128
    %949 = vmatpush.msra.mxu0 %v127
    %950 = vmatpush.msra.mxu0 %v126
    %951 = vmatpush.msra.mxu0 %v125
    %952 = vmatmul.f32.gmra.mxu0 %v934
    %v953 = vpop.f32.mrf.mxu0
    %v954 = vadd.f32 0.0, %v953
    %955 = vdwg.mxu0
    %v957 = vrot.slane %v954, 1
    %v958 = vrot.slane %v954, 2
    %v961 = vadd.f32 %v120, %v957
    %v962 = vadd.f32 %v123, %v958
    %v963 = vxor.u32 %v961, 2147483648
    %v964 = vxor.u32 %v962, 2147483648
    %v965 = vmul.f32 %v963, 1.442695
    %v966 = vpow.pop %v965
    %v967 = vmul.f32 %v964, 1.442695
    %v968 = vpow.pop %v967
    %v969 = vadd.f32 %v966, 1.0
    %v970 = vadd.f32 %v968, 1.0
    %v971 = vrcp.pop %v969
    %v972 = vmul.f32 %v969, %v971
    %v973 = vsub.f32 1.0, %v972
    %v974 = vmul.f32 %v971, %v973
    %v975 = vadd.f32 %v971, %v974
    %vm976 = vweird.f32 %v969
    %vm977 = vweird.f32 %v971
    %vm978 = vmor %vm976, %vm977
    %v979 = vsel %vm978, %v971, %v975
    %v980 = vand.u32 2147483647, %v969
    %vm981 = vcmp.eq.f32.partialorder %v980, 8.507059e+37
    %v982 = vand.u32 %v969, 2147483648
    %v983 = vor.u32 1.1754944e-38, %v982
    %v984 = vsel %vm981, %v983, %v979
    %v985 = vmul.f32 1.0, %v984
    %v986 = vrcp.pop %v970
    %v987 = vmul.f32 %v970, %v986
    %v988 = vsub.f32 1.0, %v987
    %v989 = vmul.f32 %v986, %v988
    %v990 = vadd.f32 %v986, %v989
    %vm991 = vweird.f32 %v970
    %vm992 = vweird.f32 %v986
    %vm993 = vmor %vm991, %vm992
    %v994 = vsel %vm993, %v986, %v990
    %v995 = vand.u32 2147483647, %v970
    %vm996 = vcmp.eq.f32.partialorder %v995, 8.507059e+37
    %v997 = vand.u32 %v970, 2147483648
    %v998 = vor.u32 1.1754944e-38, %v997
    %v999 = vsel %vm996, %v998, %v994
    %v1000 = vmul.f32 1.0, %v999
    %v1001 = vtanh.pop %v961
    %v1002 = vtanh.pop %v962
    %v1005 = vrot.slane %v913, 7
    %v1006 = vrot.slane %v914, 7
    %v1009 = vmul.f32 %v985, %v1005
    %v1010 = vmul.f32 %v1000, %v1006
    %1013 = vrot.lane.b32.xlu0 %v1001, 64
    %v1014 = vpop.permute.xlu0 %1013
    %1015 = vrot.lane.b32.xlu0 %v1002, 64
    %v1016 = vpop.permute.xlu0 %1015
    %v1019 = vmul.f32 %v985, %v1014
    %v1020 = vmul.f32 %v1000, %v1016
    %1023 = vrot.lane.b32.xlu0 %v1019, 32
    %v1024 = vpop.permute.xlu0 %1023
    %1025 = vrot.lane.b32.xlu0 %v1020, 32
    %v1026 = vpop.permute.xlu0 %1025
    %v1029 = vadd.f32 %v1009, %v1024
    %v1030 = vadd.f32 %v1010, %v1026
    %v1031 = vtanh.pop %v1029
    %v1032 = vtanh.pop %v1030
    %1035 = vrot.lane.b32.xlu0 %v1031, 64
    %v1036 = vpop.permute.xlu0 %1035
    %1037 = vrot.lane.b32.xlu0 %v1032, 64
    %v1038 = vpop.permute.xlu0 %1037
    %v1041 = vmul.f32 %v985, %v1036
    %v1042 = vmul.f32 %v1000, %v1038
    %1044 = vrot.lane.b32.xlu0 %v351, 64
    %v1045 = vpop.permute.xlu0 %1044
    %1047 = vrot.lane.b32.xlu0 %v467, 96
    %v1048 = vpop.permute.xlu0 %1047
    %1052 = vrot.lane.b32.xlu0 %v815, 64
    %v1053 = vpop.permute.xlu0 %1052
    %1055 = vrot.lane.b32.xlu0 %v931, 96
    %v1056 = vpop.permute.xlu0 %1055
    %v1060 = vrot.slane %v1041, 7
    %v1061 = vrot.slane %v1042, 6
    %v1062 = vsel %vm236, %v1061, %v1060
    %v1064 = vsel %vm129, %v239, %v1045
    %vm1065 = vcmask 523264
    %v1066 = vsel %vm1065, %v1064, %v1048
    %vm1067 = vcmask 785408
    %v1068 = vsel %vm1067, %v1066, %v583
    %v1069 = vsel %vm129, %v701, %v1053
    %v1070 = vsel %vm1065, %v1069, %v1056
    %v1071 = vsel %vm1067, %v1070, %v1062
    %v1072 = vld [vmem:[#allocation8] sm:$0xff]
    %v1073 = vld [vmem:[#allocation8 + $0x8] sm:$0xff]
    %v1074 = vld [vmem:[#allocation8 + $0x10] sm:$0xff]
    %v1075 = vld [vmem:[#allocation8 + $0x18] sm:$0xff]
    %v1076 = vld [vmem:[#allocation8 + $0x20] sm:$0xff]
    %v1077 = vld [vmem:[#allocation8 + $0x28] sm:$0xff]
    %v1078 = vld [vmem:[#allocation8 + $0x30] sm:$0xff]
    %v1079 = vld [vmem:[#allocation8 + $0x38] sm:$0xff]
    %v1080 = vld [vmem:[#allocation8 + $0x40] sm:$0xff]
    %v1081 = vld [vmem:[#allocation8 + $0x48] sm:$0xff]
    %v1082 = vld [vmem:[#allocation8 + $0x50] sm:$0xff]
    %v1083 = vld [vmem:[#allocation8 + $0x58] sm:$0xff]
    %v1084 = vld [vmem:[#allocation8 + $0x60] sm:$0xff]
    %v1085 = vld [vmem:[#allocation8 + $0x68] sm:$0xff]
    %v1086 = vld [vmem:[#allocation8 + $0x70] sm:$0xff]
    %v1087 = vld [vmem:[#allocation8 + $0x78] sm:$0xff]
    %v1088 = vld [vmem:[#allocation8 + $0x80] sm:$0xff]
    %v1089 = vld [vmem:[#allocation8 + $0x88] sm:$0xff]
    %v1090 = vld [vmem:[#allocation8 + $0x90] sm:$0xff]
    %v1091 = vld [vmem:[#allocation8 + $0x98] sm:$0xff]
    %v1092 = vld [vmem:[#allocation8 + $0xa0] sm:$0xff]
    %v1093 = vld [vmem:[#allocation8 + $0xa8] sm:$0xff]
    %v1094 = vld [vmem:[#allocation8 + $0xb0] sm:$0xff]
    %v1095 = vld [vmem:[#allocation8 + $0xb8] sm:$0xff]
    %v1096 = vld [vmem:[#allocation8 + $0xc0] sm:$0xff]
    %v1097 = vld [vmem:[#allocation8 + $0xc8] sm:$0xff]
    %v1098 = vld [vmem:[#allocation8 + $0xd0] sm:$0xff]
    %v1099 = vld [vmem:[#allocation8 + $0xd8] sm:$0xff]
    %v1100 = vld [vmem:[#allocation8 + $0xe0] sm:$0xff]
    %v1101 = vld [vmem:[#allocation8 + $0xe8] sm:$0xff]
    %v1102 = vld [vmem:[#allocation8 + $0xf0] sm:$0xff]
    %v1103 = vld [vmem:[#allocation8 + $0xf8] sm:$0xff]
    %v1104 = vld [vmem:[%s5] sm:$0x1]
    %v1106 = vperm.slane %v1104, 0
    %1108 = vmatpush.msra.mxu0 %v1087
    %1109 = vmatpush.msra.mxu0 %v1086
    %1110 = vmatpush.msra.mxu0 %v1085
    %1111 = vmatpush.msra.mxu0 %v1084
    %1112 = vmatpush.msra.mxu0 %v1083
    %1113 = vmatpush.msra.mxu0 %v1082
    %1114 = vmatpush.msra.mxu0 %v1081
    %1115 = vmatpush.msra.mxu0 %v1080
    %1116 = vmatpush.msra.mxu0 %v1079
    %1117 = vmatpush.msra.mxu0 %v1078
    %1118 = vmatpush.msra.mxu0 %v1077
    %1119 = vmatpush.msra.mxu0 %v1076
    %1120 = vmatpush.msra.mxu0 %v1075
    %1121 = vmatpush.msra.mxu0 %v1074
    %1122 = vmatpush.msra.mxu0 %v1073
    %1123 = vmatpush.msra.mxu0 %v1072
    %1124 = vmatmul.f32.gmra.mxu0 %v1068
    %v1125 = vpop.f32.mrf.mxu0
    %v1126 = vadd.f32 %v1106, %v1125
    %1127 = vdwg.mxu0
    %1128 = vmatpush.msra.mxu0 %v1103
    %1129 = vmatpush.msra.mxu0 %v1102
    %1130 = vmatpush.msra.mxu0 %v1101
    %1131 = vmatpush.msra.mxu0 %v1100
    %1132 = vmatpush.msra.mxu0 %v1099
    %1133 = vmatpush.msra.mxu0 %v1098
    %1134 = vmatpush.msra.mxu0 %v1097
    %1135 = vmatpush.msra.mxu0 %v1096
    %1136 = vmatpush.msra.mxu0 %v1095
    %1137 = vmatpush.msra.mxu0 %v1094
    %1138 = vmatpush.msra.mxu0 %v1093
    %1139 = vmatpush.msra.mxu0 %v1092
    %1140 = vmatpush.msra.mxu0 %v1091
    %1141 = vmatpush.msra.mxu0 %v1090
    %1142 = vmatpush.msra.mxu0 %v1089
    %1143 = vmatpush.msra.mxu0 %v1088
    %1144 = vmatmul.f32.gmra.mxu0 %v1071
    %v1145 = vpop.f32.mrf.mxu0
    %v1146 = vadd.f32 %v1126, %v1145
    %1147 = vdwg.mxu0
    %1148 = vst [vmem:[#allocation10] sm:$0x3] %v1146
    // Predicated region
    $region42: #{tpu_custom_call.1} parent=1 // pred_check
      _
    $region43: #{tpu_custom_call.1} parent=1 // pred_check_branch
      %1150 = sbr.rel (0) target = $region45
    $region44: #{tpu_custom_call.1} parent=1 // pred_region
      %1152 = vsyncadd [#allocation4], 0
      %s1154 = sshll.u32 [#allocation10], 4
      %s1155 = int_to_ptr.vmem [resolvable:$true] %s1154
      %s1156 = sshll.u32 %s6, 4
      %s1157 = int_to_ptr.hbm [resolvable:$true] %s1156
      %1159 = dma.vmem_to_hbm [thread:$0]  %s1155, 32, %s1157, [#allocation4]
    $region45: #{tpu_custom_call.1} parent=1 // pred_fallthru
      _
    // Predicated region
    $region46: #{tpu_custom_call.1} parent=1 // pred_check
      _
    $region47: #{tpu_custom_call.1} parent=1 // pred_check_branch
      %1161 = sbr.rel (0) target = $region49
    $region48: #{tpu_custom_call.1} parent=1 // pred_region
      %1163 = dma.done [#allocation4], 32
    $region49: #{tpu_custom_call.1} parent=1 // pred_fallthru
      _
    %1164 = vsyncpa [#allocation3], 1
    %1165 = vsyncpa [#allocation6], 1
    %1166 = vsyncpa [#allocation9], 1
    %1167 = vsyncpa [#allocation4], 1

</llo_original>
